<compile_context>
chip_gen: v7x
topology: tpu7x:2x2x1
jax: 0.10.0
libtpu: 0.0.40
codegen_flags: <defaults>
</compile_context>

<pallas_src>
import jax
import jax.numpy as jnp
from jax.experimental import pallas as pl
from jax.experimental.pallas import tpu as pltpu


# --------------------------------------------------------------------------
# Shared math helpers
# --------------------------------------------------------------------------
def _layer_norm(x, gamma, beta, eps=1e-5):
    mu = jnp.mean(x, axis=-1, keepdims=True)
    var = jnp.mean(jnp.square(x - mu), axis=-1, keepdims=True)
    return (x - mu) * jax.lax.rsqrt(var + eps) * gamma + beta


def _gelu_tanh(x):
    # TODO(synk): PyTorch nn.GELU default is exact erf; the tanh approximation
    # is used (in kernel AND reference) for robust Mosaic lowering (~1e-3 abs).
    c0 = 0.7978845608028654  # sqrt(2/pi)
    return 0.5 * x * (1.0 + jnp.tanh(c0 * (x + 0.044715 * x * x * x)))


# --------------------------------------------------------------------------
# Pallas kernel: one grid step == one graph.
# --------------------------------------------------------------------------
def gat_kernel(nf_ref, ef_ref, adj_ref, wl_ref, w1ab_ref, w1c_ref, vec_ref,
               out_ref):
    n, c_in = nf_ref.shape
    p = wl_ref.shape[1]
    d = w1c_ref.shape[1]

    # Packed row-vector parameters (one VMEM slab -> one DMA).
    g1 = vec_ref[0:1, :c_in]
    be1 = vec_ref[1:2, :c_in]
    bl = vec_ref[2:3, :p]
    b1 = vec_ref[3:4, :d]
    w2r = vec_ref[4:5, :d]
    g2 = vec_ref[5:6, :p]
    be2 = vec_ref[6:7, :p]
    b2 = vec_ref[7:8, 0:1]

    # ----- self.linear: LayerNorm(C_in) + Linear(C_in -> P) -----
    xn = _layer_norm(nf_ref[...], g1, be1)
    h = jnp.dot(xn, wl_ref[...], preferred_element_type=jnp.float32) + bl  # [N,P]

    # ----- normalize_adjacent_matrix: D^-1/2 (A+I) D^-1/2 (used as >0 mask) --
    adj = adj_ref[...]
    row = jax.lax.broadcasted_iota(jnp.int32, (n, n), 0)
    col = jax.lax.broadcasted_iota(jnp.int32, (n, n), 1)
    a_plus_i = adj + jnp.where(row == col, 1.0, 0.0).astype(adj.dtype)
    deg = jnp.sum(a_plus_i, axis=-1, keepdims=True)                       # [N,1]
    dcol = jax.lax.rsqrt(deg)
    dcol = jnp.where(jnp.isnan(dcol), 0.0, dcol)   # mirrors torch.isnan fixup
    a_norm = dcol * a_plus_i * jnp.transpose(dcol)                        # [N,N]

    # ----- attention MLP on [h_i ; h_j ; e_ij], concat decomposed -----
    zab = jnp.dot(h, w1ab_ref[...], preferred_element_type=jnp.float32)   # [N,2D]
    za, zb = zab[:, :d], zab[:, d:]
    zc = jnp.dot(ef_ref[...], w1c_ref[...],
                 preferred_element_type=jnp.float32)                      # [N*N,D]
    z = za[:, None, :] + zb[None, :, :] + zc.reshape(n, n, d) + b1[None]  # [N,N,D]
    gz = _gelu_tanh(z)
    # D -> 1 projection as a VPU multiply + lane reduction (not an MXU matmul).
    score = jnp.sum(gz * w2r[None, :, :], axis=-1) + b2                   # [N,N]

    # ----- leaky_relu(0.2), adjacency masking, softmax(dim=-1) -----
    score = jnp.where(score >= 0, score, 0.2 * score)
    score = jnp.where(a_norm > 0, score, jnp.full_like(score, -1.0e12))
    score = score - jnp.max(score, axis=-1, keepdims=True)
    es = jnp.exp(score)
    attn = es * pl.reciprocal(jnp.sum(es, axis=-1, keepdims=True), approx=True)

    # ----- aggregate + last LayerNorm(P) -----
    out = jnp.dot(attn, h, preferred_element_type=jnp.float32)            # [N,P]
    out_ref[...] = _layer_norm(out, g2, be2).astype(out_ref.dtype)


# --------------------------------------------------------------------------
# Wrapper: parameter packing + batched pallas_call
# --------------------------------------------------------------------------
def _pack_params(params):
    """Fuse w1a/w1b and pack all small row-vector params into one (8, L) slab."""
    wl = params["wl"]
    w1 = params["w1"]
    c_in, p = wl.shape
    d = w1.shape[1]
    w1ab = jnp.concatenate([w1[:p], w1[p:2 * p]], axis=1)   # [P, 2D]
    w1c = w1[2 * p:]                                        # [C_e, D]

    l = max(c_in, p, d)
    slab = jnp.zeros((8, l), jnp.float32)
    slab = slab.at[0, :c_in].set(params["g1"].reshape(-1))
    slab = slab.at[1, :c_in].set(params["be1"].reshape(-1))
    slab = slab.at[2, :p].set(params["bl"].reshape(-1))
    slab = slab.at[3, :d].set(params["b1"].reshape(-1))
    slab = slab.at[4, :d].set(params["w2"].reshape(-1))
    slab = slab.at[5, :p].set(params["g2"].reshape(-1))
    slab = slab.at[6, :p].set(params["be2"].reshape(-1))
    slab = slab.at[7, 0].set(params["b2"].reshape(()))
    return wl, w1ab, w1c, slab


@jax.jit
def gat_layer(node_features, edge_features, node_adjacent, params):
    """Batched forward.

    node_features: [B, N, C_in], edge_features: [B, N, N, C_e],
    node_adjacent: [B, N, N]  ->  [B, N, P]
    """
    # Mirrors the PyTorch `if sum(node_features.shape) == 0` early return.
    if sum(node_features.shape) == 0:
        return node_features

    b, n, c_in = node_features.shape
    c_e = edge_features.shape[-1]
    wl, w1ab, w1c, slab = _pack_params(params)
    p = wl.shape[1]
    d = w1c.shape[1]
    l = slab.shape[1]

    # Flatten the pairwise edge features in the wrapper (pure layout plumbing).
    ef_flat = edge_features.reshape(b, n * n, c_e)

    return pl.pallas_call(
        gat_kernel,
        out_shape=jax.ShapeDtypeStruct((b, n, p), jnp.float32),
        grid=(b,),
        in_specs=[
            pl.BlockSpec((None, n, c_in), lambda i: (i, 0, 0)),
            pl.BlockSpec((None, n * n, c_e), lambda i: (i, 0, 0)),
            pl.BlockSpec((None, n, n), lambda i: (i, 0, 0)),
            # Parameters: block index never changes -> DMA'd once for the grid.
            pl.BlockSpec((c_in, p), lambda i: (0, 0)),
            pl.BlockSpec((p, 2 * d), lambda i: (0, 0)),
            pl.BlockSpec((c_e, d), lambda i: (0, 0)),
            pl.BlockSpec((8, l), lambda i: (0, 0)),
        ],
        out_specs=pl.BlockSpec((None, n, p), lambda i: (i, 0, 0)),
        compiler_params=pltpu.CompilerParams(
            dimension_semantics=("parallel",)),
    )(node_features, ef_flat, node_adjacent, wl, w1ab, w1c, slab)


# --------------------------------------------------------------------------
# Deterministic parameter init (mirrors the PyTorch module's shapes)
# --------------------------------------------------------------------------
def init_params(key, ndim_node_in, ndim_node_out, ndim_edge):
    d = 2 * ndim_node_out + ndim_edge
    ks = jax.random.split(key, 6)

    wl = jax.random.normal(ks[0], (ndim_node_in, ndim_node_out), jnp.float32)
    wl = wl / jnp.sqrt(jnp.float32(ndim_node_in))
    bl = 0.01 * jax.random.normal(ks[1], (ndim_node_out,), jnp.float32)

    w1 = jax.random.normal(ks[2], (d, d), jnp.float32) / jnp.sqrt(jnp.float32(d))
    b1 = 0.01 * jax.random.normal(ks[3], (d,), jnp.float32)

    w2 = jax.random.normal(ks[4], (d, 1), jnp.float32) / jnp.sqrt(jnp.float32(d))
    b2 = 0.01 * jax.random.normal(ks[5], (1,), jnp.float32)

    return {
        "g1": jnp.ones((ndim_node_in,), jnp.float32),      # LayerNorm(C_in)
        "be1": jnp.zeros((ndim_node_in,), jnp.float32),
        "wl": wl, "bl": bl,                                # Linear(C_in -> P)
        "w1": w1, "b1": b1,                                # attn Linear(D -> D)
        "w2": w2, "b2": b2,                                # attn Linear(D -> 1)
        "g2": jnp.ones((ndim_node_out,), jnp.float32),     # LayerNorm(P)
        "be2": jnp.zeros((ndim_node_out,), jnp.float32),
    }


# --------------------------------------------------------------------------
# Pure-JAX reference: literal translation of the PyTorch forward (per graph).
# --------------------------------------------------------------------------
def gat_reference(nf, ef, adj, params):
    x = _layer_norm(nf, params["g1"], params["be1"])
    h = x @ params["wl"] + params["bl"]
    n, p = h.shape

    a = adj + jnp.eye(n, dtype=adj.dtype)
    degree = 1.0 / jnp.sqrt(jnp.sum(a, axis=-1))
    degree = jnp.where(jnp.isnan(degree), 0.0, degree)
    d05 = jnp.diag(degree)
    a_norm = d05 @ a @ d05

    hi = jnp.repeat(h, n, axis=0)          # row i*N+j -> h[i]
    hj = jnp.tile(h, (n, 1))               # row i*N+j -> h[j]
    expand = jnp.concatenate([hi, hj], axis=-1).reshape(n, n, 2 * p)
    expand = jnp.concatenate([expand, ef], axis=-1)

    s = _gelu_tanh(expand @ params["w1"] + params["b1"]) @ params["w2"] \
        + params["b2"]
    s = s[..., 0]
    s = jnp.where(s >= 0, s, 0.2 * s)
    s = jnp.where(a_norm > 0, s, jnp.full_like(s, -1.0e12))
    attn = jax.nn.softmax(s, axis=-1)
    return _layer_norm(attn @ h, params["g2"], params["be2"])


# --------------------------------------------------------------------------
if __name__ == "__main__":
    key = jax.random.PRNGKey(0)
    B, N, C_IN, P, C_E = 4, 8, 16, 32, 8

    k_nf, k_ef, k_adj, k_par = jax.random.split(key, 4)
    node_features = jax.random.normal(k_nf, (B, N, C_IN), jnp.float32)
    edge_features = jax.random.normal(k_ef, (B, N, N, C_E), jnp.float32)
    node_adjacent = (jax.random.uniform(k_adj, (B, N, N)) > 0.5).astype(
        jnp.float32)
    params = init_params(k_par, C_IN, P, C_E)

    out = gat_layer(node_features, edge_features, node_adjacent, params)
    out = jax.block_until_ready(out)

    ref = jax.vmap(lambda nf, ef, a: gat_reference(nf, ef, a, params))(
        node_features, edge_features, node_adjacent)

    assert out.shape == (B, N, P), out.shape
    assert bool(jnp.all(jnp.isfinite(out)))
    assert bool(jnp.allclose(out, ref, atol=2e-3, rtol=2e-3)), (
        float(jnp.max(jnp.abs(out - ref))))
    print("KERNEL_OK")
</pallas_src>

<mosaic_0001>
module attributes {stable_mosaic.version = 11 : i64} {
  func.func @gat_kernel(%arg0: i32, %arg1: memref<1x8x16xf32, #tpu.memory_space<vmem>>, %arg2: memref<1x64x8xf32, #tpu.memory_space<vmem>>, %arg3: memref<1x8x8xf32, #tpu.memory_space<vmem>>, %arg4: memref<16x32xf32, #tpu.memory_space<vmem>>, %arg5: memref<32x144xf32, #tpu.memory_space<vmem>>, %arg6: memref<8x72xf32, #tpu.memory_space<vmem>>, %arg7: memref<8x72xf32, #tpu.memory_space<vmem>>, %arg8: memref<1x8x32xf32, #tpu.memory_space<vmem>>) attributes {dimension_semantics = [#tpu.dimension_semantics<parallel>], iteration_bounds = array<i64: 4>, scalar_prefetch = 0 : i64, scratch_operands = 0 : i64, tpu.core_type = #tpu.core_type<tc>, window_params = [{transform_indices = @transform_0, window_bounds = array<i64: 1, 8, 16>}, {transform_indices = @transform_1, window_bounds = array<i64: 1, 64, 8>}, {transform_indices = @transform_2, window_bounds = array<i64: 1, 8, 8>}, {pipeline_mode = #tpu.pipeline_mode<synchronous>, transform_indices = @transform_3, window_bounds = array<i64: 16, 32>}, {pipeline_mode = #tpu.pipeline_mode<synchronous>, transform_indices = @transform_4, window_bounds = array<i64: 32, 144>}, {pipeline_mode = #tpu.pipeline_mode<synchronous>, transform_indices = @transform_5, window_bounds = array<i64: 8, 72>}, {pipeline_mode = #tpu.pipeline_mode<synchronous>, transform_indices = @transform_6, window_bounds = array<i64: 8, 72>}, {transform_indices = @transform_7, window_bounds = array<i64: 1, 8, 32>}]} {
    %c0 = arith.constant 0 : index
    %c0_0 = arith.constant 0 : index
    %0 = vector.load %arg7[%c0, %c0_0] : memref<8x72xf32, #tpu.memory_space<vmem>>, vector<1x16xf32>
    %c1 = arith.constant 1 : index
    %c0_1 = arith.constant 0 : index
    %1 = vector.load %arg7[%c1, %c0_1] : memref<8x72xf32, #tpu.memory_space<vmem>>, vector<1x16xf32>
    %c2 = arith.constant 2 : index
    %c0_2 = arith.constant 0 : index
    %2 = vector.load %arg7[%c2, %c0_2] : memref<8x72xf32, #tpu.memory_space<vmem>>, vector<1x32xf32>
    %c3 = arith.constant 3 : index
    %c0_3 = arith.constant 0 : index
    %3 = vector.load %arg7[%c3, %c0_3] : memref<8x72xf32, #tpu.memory_space<vmem>>, vector<1x72xf32>
    %c4 = arith.constant 4 : index
    %c0_4 = arith.constant 0 : index
    %4 = vector.load %arg7[%c4, %c0_4] : memref<8x72xf32, #tpu.memory_space<vmem>>, vector<1x72xf32>
    %c5 = arith.constant 5 : index
    %c0_5 = arith.constant 0 : index
    %5 = vector.load %arg7[%c5, %c0_5] : memref<8x72xf32, #tpu.memory_space<vmem>>, vector<1x32xf32>
    %c6 = arith.constant 6 : index
    %c0_6 = arith.constant 0 : index
    %6 = vector.load %arg7[%c6, %c0_6] : memref<8x72xf32, #tpu.memory_space<vmem>>, vector<1x32xf32>
    %c7 = arith.constant 7 : index
    %c0_7 = arith.constant 0 : index
    %7 = vector.load %arg7[%c7, %c0_7] : memref<8x72xf32, #tpu.memory_space<vmem>>, vector<1x1xf32>
    %c0_8 = arith.constant 0 : index
    %c0_9 = arith.constant 0 : index
    %c0_10 = arith.constant 0 : index
    %8 = vector.load %arg1[%c0_8, %c0_9, %c0_10] : memref<1x8x16xf32, #tpu.memory_space<vmem>>, vector<1x8x16xf32>
    %9 = vector.shape_cast %8 : vector<1x8x16xf32> to vector<8x16xf32>
    %cst = arith.constant dense<0.000000e+00> : vector<8xf32>
    %10 = vector.multi_reduction <add>, %9, %cst [1] : vector<8x16xf32> to vector<8xf32>
    %11 = vector.shape_cast %10 : vector<8xf32> to vector<8x1xf32>
    %cst_11 = arith.constant 1.600000e+01 : f32
    %12 = vector.broadcast %cst_11 : f32 to vector<8x1xf32>
    %13 = arith.divf %11, %12 : vector<8x1xf32>
    %14 = vector.broadcast %13 : vector<8x1xf32> to vector<8x16xf32>
    %15 = arith.subf %9, %14 : vector<8x16xf32>
    %16 = arith.mulf %15, %15 : vector<8x16xf32>
    %cst_12 = arith.constant dense<0.000000e+00> : vector<8xf32>
    %17 = vector.multi_reduction <add>, %16, %cst_12 [1] : vector<8x16xf32> to vector<8xf32>
    %18 = vector.shape_cast %17 : vector<8xf32> to vector<8x1xf32>
    %cst_13 = arith.constant 1.600000e+01 : f32
    %19 = vector.broadcast %cst_13 : f32 to vector<8x1xf32>
    %20 = arith.divf %18, %19 : vector<8x1xf32>
    %21 = vector.broadcast %13 : vector<8x1xf32> to vector<8x16xf32>
    %22 = arith.subf %9, %21 : vector<8x16xf32>
    %cst_14 = arith.constant 9.99999974E-6 : f32
    %23 = vector.broadcast %cst_14 : f32 to vector<8x1xf32>
    %24 = arith.addf %20, %23 : vector<8x1xf32>
    %25 = math.rsqrt %24 : vector<8x1xf32>
    %26 = vector.broadcast %25 : vector<8x1xf32> to vector<8x16xf32>
    %27 = arith.mulf %22, %26 : vector<8x16xf32>
    %28 = vector.broadcast %0 : vector<1x16xf32> to vector<8x16xf32>
    %29 = arith.mulf %27, %28 : vector<8x16xf32>
    %30 = vector.broadcast %1 : vector<1x16xf32> to vector<8x16xf32>
    %31 = arith.addf %29, %30 : vector<8x16xf32>
    %c0_15 = arith.constant 0 : index
    %c0_16 = arith.constant 0 : index
    %32 = vector.load %arg4[%c0_15, %c0_16] : memref<16x32xf32, #tpu.memory_space<vmem>>, vector<16x32xf32>
    %cst_17 = arith.constant dense<0.000000e+00> : vector<8x32xf32>
    %33 = tpu.matmul %31, %32, %cst_17 {dimension_numbers = #tpu.dot_dimension_numbers<[1], [0], [0], [1], [0, 0, 1, 1], [], []>} : vector<8x16xf32>, vector<16x32xf32>, vector<8x32xf32> -> vector<8x32xf32>
    %34 = vector.broadcast %2 : vector<1x32xf32> to vector<8x32xf32>
    %35 = arith.addf %33, %34 : vector<8x32xf32>
    %c0_18 = arith.constant 0 : index
    %c0_19 = arith.constant 0 : index
    %c0_20 = arith.constant 0 : index
    %36 = vector.load %arg3[%c0_18, %c0_19, %c0_20] : memref<1x8x8xf32, #tpu.memory_space<vmem>>, vector<1x8x8xf32>
    %37 = vector.shape_cast %36 : vector<1x8x8xf32> to vector<8x8xf32>
    %38 = tpu.iota {dimensions = array<i32: 0>} : vector<8x8xi32>
    %39 = tpu.iota {dimensions = array<i32: 1>} : vector<8x8xi32>
    %40 = arith.cmpi eq, %38, %39 : vector<8x8xi32>
    %cst_21 = arith.constant 1.000000e+00 : f32
    %cst_22 = arith.constant 0.000000e+00 : f32
    %41 = vector.broadcast %cst_21 : f32 to vector<8x8xf32>
    %42 = vector.broadcast %cst_22 : f32 to vector<8x8xf32>
    %43 = arith.select %40, %41, %42 : vector<8x8xi1>, vector<8x8xf32>
    %44 = arith.addf %37, %43 : vector<8x8xf32>
    %cst_23 = arith.constant dense<0.000000e+00> : vector<8xf32>
    %45 = vector.multi_reduction <add>, %44, %cst_23 [1] : vector<8x8xf32> to vector<8xf32>
    %46 = vector.shape_cast %45 : vector<8xf32> to vector<8x1xf32>
    %47 = math.rsqrt %46 : vector<8x1xf32>
    %48 = arith.cmpf one, %47, %47 : vector<8x1xf32>
    %cst_24 = arith.constant 0.000000e+00 : f32
    %49 = vector.broadcast %cst_24 : f32 to vector<8x1xf32>
    %50 = arith.select %48, %49, %47 : vector<8x1xi1>, vector<8x1xf32>
    %51 = vector.broadcast %50 : vector<8x1xf32> to vector<8x8xf32>
    %52 = arith.mulf %51, %44 : vector<8x8xf32>
    %53 = tpu.transpose %50, [1, 0] : vector<8x1xf32> -> vector<1x8xf32>
    %54 = vector.broadcast %53 : vector<1x8xf32> to vector<8x8xf32>
    %55 = arith.mulf %52, %54 : vector<8x8xf32>
    %c0_25 = arith.constant 0 : index
    %c0_26 = arith.constant 0 : index
    %56 = vector.load %arg5[%c0_25, %c0_26] : memref<32x144xf32, #tpu.memory_space<vmem>>, vector<32x144xf32>
    %cst_27 = arith.constant dense<0.000000e+00> : vector<8x144xf32>
    %57 = tpu.matmul %35, %56, %cst_27 {dimension_numbers = #tpu.dot_dimension_numbers<[1], [0], [0], [1], [0, 0, 1, 1], [], []>} : vector<8x32xf32>, vector<32x144xf32>, vector<8x144xf32> -> vector<8x144xf32>
    %58 = vector.extract_strided_slice %57 {offsets = [0, 0], sizes = [8, 72], strides = [1, 1]} : vector<8x144xf32> to vector<8x72xf32>
    %59 = vector.extract_strided_slice %57 {offsets = [0, 72], sizes = [8, 72], strides = [1, 1]} : vector<8x144xf32> to vector<8x72xf32>
    %c0_28 = arith.constant 0 : index
    %c0_29 = arith.constant 0 : index
    %c0_30 = arith.constant 0 : index
    %60 = vector.load %arg2[%c0_28, %c0_29, %c0_30] : memref<1x64x8xf32, #tpu.memory_space<vmem>>, vector<1x64x8xf32>
    %61 = vector.shape_cast %60 : vector<1x64x8xf32> to vector<64x8xf32>
    %c0_31 = arith.constant 0 : index
    %c0_32 = arith.constant 0 : index
    %62 = vector.load %arg6[%c0_31, %c0_32] : memref<8x72xf32, #tpu.memory_space<vmem>>, vector<8x72xf32>
    %cst_33 = arith.constant dense<0.000000e+00> : vector<64x72xf32>
    %63 = tpu.matmul %61, %62, %cst_33 {dimension_numbers = #tpu.dot_dimension_numbers<[1], [0], [0], [1], [0, 0, 1, 1], [], []>} : vector<64x8xf32>, vector<8x72xf32>, vector<64x72xf32> -> vector<64x72xf32>
    %64 = vector.shape_cast %58 : vector<8x72xf32> to vector<8x1x72xf32>
    %65 = vector.shape_cast %59 : vector<8x72xf32> to vector<1x8x72xf32>
    %66 = vector.broadcast %64 : vector<8x1x72xf32> to vector<8x8x72xf32>
    %67 = vector.broadcast %65 : vector<1x8x72xf32> to vector<8x8x72xf32>
    %68 = arith.addf %66, %67 : vector<8x8x72xf32>
    %69 = vector.shape_cast %63 : vector<64x72xf32> to vector<8x8x72xf32>
    %70 = arith.addf %68, %69 : vector<8x8x72xf32>
    %71 = vector.shape_cast %3 : vector<1x72xf32> to vector<1x1x72xf32>
    %72 = vector.broadcast %71 : vector<1x1x72xf32> to vector<8x8x72xf32>
    %73 = arith.addf %70, %72 : vector<8x8x72xf32>
    %cst_34 = arith.constant 5.000000e-01 : f32
    %74 = vector.broadcast %cst_34 : f32 to vector<8x8x72xf32>
    %75 = arith.mulf %74, %73 : vector<8x8x72xf32>
    %cst_35 = arith.constant 4.471500e-02 : f32
    %76 = vector.broadcast %cst_35 : f32 to vector<8x8x72xf32>
    %77 = arith.mulf %76, %73 : vector<8x8x72xf32>
    %78 = arith.mulf %77, %73 : vector<8x8x72xf32>
    %79 = arith.mulf %78, %73 : vector<8x8x72xf32>
    %80 = arith.addf %73, %79 : vector<8x8x72xf32>
    %cst_36 = arith.constant 0.797884583 : f32
    %81 = vector.broadcast %cst_36 : f32 to vector<8x8x72xf32>
    %82 = arith.mulf %81, %80 : vector<8x8x72xf32>
    %83 = math.tanh %82 : vector<8x8x72xf32>
    %cst_37 = arith.constant 1.000000e+00 : f32
    %84 = vector.broadcast %cst_37 : f32 to vector<8x8x72xf32>
    %85 = arith.addf %84, %83 : vector<8x8x72xf32>
    %86 = arith.mulf %75, %85 : vector<8x8x72xf32>
    %87 = vector.shape_cast %4 : vector<1x72xf32> to vector<1x1x72xf32>
    %88 = vector.broadcast %87 : vector<1x1x72xf32> to vector<8x8x72xf32>
    %89 = arith.mulf %86, %88 : vector<8x8x72xf32>
    %cst_38 = arith.constant dense<0.000000e+00> : vector<8x8xf32>
    %90 = vector.multi_reduction <add>, %89, %cst_38 [2] : vector<8x8x72xf32> to vector<8x8xf32>
    %91 = vector.broadcast %7 : vector<1x1xf32> to vector<8x8xf32>
    %92 = arith.addf %90, %91 : vector<8x8xf32>
    %cst_39 = arith.constant 0.000000e+00 : f32
    %93 = vector.broadcast %cst_39 : f32 to vector<8x8xf32>
    %94 = arith.cmpf oge, %92, %93 : vector<8x8xf32>
    %cst_40 = arith.constant 2.000000e-01 : f32
    %95 = vector.broadcast %cst_40 : f32 to vector<8x8xf32>
    %96 = arith.mulf %95, %92 : vector<8x8xf32>
    %97 = arith.select %94, %92, %96 : vector<8x8xi1>, vector<8x8xf32>
    %cst_41 = arith.constant 0.000000e+00 : f32
    %98 = vector.broadcast %cst_41 : f32 to vector<8x8xf32>
    %99 = arith.cmpf ogt, %55, %98 : vector<8x8xf32>
    %cst_42 = arith.constant -9.99999995E+11 : f32
    %100 = vector.broadcast %cst_42 : f32 to vector<8x8xf32>
    %101 = arith.select %99, %97, %100 : vector<8x8xi1>, vector<8x8xf32>
    %cst_43 = arith.constant dense<0xFF800000> : vector<8xf32>
    %102 = vector.multi_reduction <maximumf>, %101, %cst_43 [1] : vector<8x8xf32> to vector<8xf32>
    %103 = vector.shape_cast %102 : vector<8xf32> to vector<8x1xf32>
    %104 = vector.broadcast %103 : vector<8x1xf32> to vector<8x8xf32>
    %105 = arith.subf %101, %104 : vector<8x8xf32>
    %106 = math.exp %105 : vector<8x8xf32>
    %cst_44 = arith.constant dense<0.000000e+00> : vector<8xf32>
    %107 = vector.multi_reduction <add>, %106, %cst_44 [1] : vector<8x8xf32> to vector<8xf32>
    %108 = vector.shape_cast %107 : vector<8xf32> to vector<8x1xf32>
    %109 = tpu.reciprocal %108 {approx = true} : vector<8x1xf32> -> vector<8x1xf32>
    %110 = vector.broadcast %109 : vector<8x1xf32> to vector<8x8xf32>
    %111 = arith.mulf %106, %110 : vector<8x8xf32>
    %cst_45 = arith.constant dense<0.000000e+00> : vector<8x32xf32>
    %112 = tpu.matmul %111, %35, %cst_45 {dimension_numbers = #tpu.dot_dimension_numbers<[1], [0], [0], [1], [0, 0, 1, 1], [], []>} : vector<8x8xf32>, vector<8x32xf32>, vector<8x32xf32> -> vector<8x32xf32>
    %cst_46 = arith.constant dense<0.000000e+00> : vector<8xf32>
    %113 = vector.multi_reduction <add>, %112, %cst_46 [1] : vector<8x32xf32> to vector<8xf32>
    %114 = vector.shape_cast %113 : vector<8xf32> to vector<8x1xf32>
    %cst_47 = arith.constant 3.200000e+01 : f32
    %115 = vector.broadcast %cst_47 : f32 to vector<8x1xf32>
    %116 = arith.divf %114, %115 : vector<8x1xf32>
    %117 = vector.broadcast %116 : vector<8x1xf32> to vector<8x32xf32>
    %118 = arith.subf %112, %117 : vector<8x32xf32>
    %119 = arith.mulf %118, %118 : vector<8x32xf32>
    %cst_48 = arith.constant dense<0.000000e+00> : vector<8xf32>
    %120 = vector.multi_reduction <add>, %119, %cst_48 [1] : vector<8x32xf32> to vector<8xf32>
    %121 = vector.shape_cast %120 : vector<8xf32> to vector<8x1xf32>
    %cst_49 = arith.constant 3.200000e+01 : f32
    %122 = vector.broadcast %cst_49 : f32 to vector<8x1xf32>
    %123 = arith.divf %121, %122 : vector<8x1xf32>
    %124 = vector.broadcast %116 : vector<8x1xf32> to vector<8x32xf32>
    %125 = arith.subf %112, %124 : vector<8x32xf32>
    %cst_50 = arith.constant 9.99999974E-6 : f32
    %126 = vector.broadcast %cst_50 : f32 to vector<8x1xf32>
    %127 = arith.addf %123, %126 : vector<8x1xf32>
    %128 = math.rsqrt %127 : vector<8x1xf32>
    %129 = vector.broadcast %128 : vector<8x1xf32> to vector<8x32xf32>
    %130 = arith.mulf %125, %129 : vector<8x32xf32>
    %131 = vector.broadcast %5 : vector<1x32xf32> to vector<8x32xf32>
    %132 = arith.mulf %130, %131 : vector<8x32xf32>
    %133 = vector.broadcast %6 : vector<1x32xf32> to vector<8x32xf32>
    %134 = arith.addf %132, %133 : vector<8x32xf32>
    %c0_51 = arith.constant 0 : index
    %c0_52 = arith.constant 0 : index
    %c0_53 = arith.constant 0 : index
    %135 = vector.load %arg8[%c0_51, %c0_52, %c0_53] : memref<1x8x32xf32, #tpu.memory_space<vmem>>, vector<1x8x32xf32>
    %136 = vector.shape_cast %135 : vector<1x8x32xf32> to vector<8x32xf32>
    %137 = vector.shape_cast %134 : vector<8x32xf32> to vector<1x8x32xf32>
    tpu.vector_store %arg8[%c0_51, %c0_52, %c0_53], %137 {strides = array<i32>} : memref<1x8x32xf32, #tpu.memory_space<vmem>>, vector<1x8x32xf32>,
    return
  }
  func.func @transform_0(%arg0: i32) -> (i32, i32, i32) {
    %c0_i32 = arith.constant 0 : i32
    %c0_i32_0 = arith.constant 0 : i32
    %c0_i32_1 = arith.constant 0 : i32
    return %arg0, %c0_i32, %c0_i32_0 : i32, i32, i32
  }
  func.func @transform_1(%arg0: i32) -> (i32, i32, i32) {
    %c0_i32 = arith.constant 0 : i32
    %c0_i32_0 = arith.constant 0 : i32
    %c0_i32_1 = arith.constant 0 : i32
    return %arg0, %c0_i32, %c0_i32_0 : i32, i32, i32
  }
  func.func @transform_2(%arg0: i32) -> (i32, i32, i32) {
    %c0_i32 = arith.constant 0 : i32
    %c0_i32_0 = arith.constant 0 : i32
    %c0_i32_1 = arith.constant 0 : i32
    return %arg0, %c0_i32, %c0_i32_0 : i32, i32, i32
  }
  func.func @transform_3(%arg0: i32) -> (i32, i32) {
    %c0_i32 = arith.constant 0 : i32
    %c0_i32_0 = arith.constant 0 : i32
    %c0_i32_1 = arith.constant 0 : i32
    return %c0_i32, %c0_i32_0 : i32, i32
  }
  func.func @transform_4(%arg0: i32) -> (i32, i32) {
    %c0_i32 = arith.constant 0 : i32
    %c0_i32_0 = arith.constant 0 : i32
    %c0_i32_1 = arith.constant 0 : i32
    return %c0_i32, %c0_i32_0 : i32, i32
  }
  func.func @transform_5(%arg0: i32) -> (i32, i32) {
    %c0_i32 = arith.constant 0 : i32
    %c0_i32_0 = arith.constant 0 : i32
    %c0_i32_1 = arith.constant 0 : i32
    return %c0_i32, %c0_i32_0 : i32, i32
  }
  func.func @transform_6(%arg0: i32) -> (i32, i32) {
    %c0_i32 = arith.constant 0 : i32
    %c0_i32_0 = arith.constant 0 : i32
    %c0_i32_1 = arith.constant 0 : i32
    return %c0_i32, %c0_i32_0 : i32, i32
  }
  func.func @transform_7(%arg0: i32) -> (i32, i32, i32) {
    %c0_i32 = arith.constant 0 : i32
    %c0_i32_0 = arith.constant 0 : i32
    %c0_i32_1 = arith.constant 0 : i32
    return %arg0, %c0_i32, %c0_i32_0 : i32, i32, i32
  }
}

</mosaic_0001>

<llo_original>
// kernel: gat_layer.1
$region0: #{gat_layer.1}
  #allocation0 [shape = 'u32[]', space=smem, size = 0x4, offset = 0x4, fixed_abs, tag = 'smem constant byte address 0x4 - core index']
  #allocation1 [shape = 'u32[144,128]{1,0:T(1,128)}', space=vmem, size = 0x12000, scoped, tag = 'internal scratch']
  %s0 = inlined_call_operand.vmem [shape: f32[4,8,16], index: 0, kind: input, shape index: {}]
  %s1 = inlined_call_operand.vmem [shape: f32[4,64,8], index: 1, kind: input, shape index: {}]
  %s2 = inlined_call_operand.vmem [shape: f32[4,8,8], index: 2, kind: input, shape index: {}]
  %s3 = inlined_call_operand.vmem [shape: f32[16,32], index: 3, kind: input, shape index: {}]
  %s4 = inlined_call_operand.vmem [shape: f32[32,144], index: 4, kind: input, shape index: {}]
  %s5 = inlined_call_operand.vmem [shape: f32[8,72], index: 5, kind: input, shape index: {}]
  %s6 = inlined_call_operand.vmem [shape: f32[8,72], index: 6, kind: input, shape index: {}]
  %s7 = inlined_call_operand.hbm [shape: f32[4,8,32], index: 7, kind: output, shape index: {}]
  %s8 = sld [smem:[#allocation0]]
  $region61: #{gat_layer.1} parent=0
    _
  %s10 = ssub.s32 1, %s8
  %s11 = scalar_select 0, %s10, %s8
  $region1: #{gat_layer.1} parent=0
    #allocation2 [shape = 'u8[8192]{0}', space=vmem, size = 0x2000, scoped, tag = 'output window, operand 0']
    #allocation3 [shape = 's32[2]{0}', space=sflag, size = 0x8, scoped, tag = 'scoped memory for gat_layer.1']
    %12 = vsyncpa [#allocation3], 0
    %s13 = scalar_lea.sflag [#allocation3], 1
    %14 = vsyncpa %s13, 0
    loop: start=0, step=1, limit=6
    $region2: #{gat_layer.1} parent=1 // loop_pre_header
      _
    $region3: #{gat_layer.1} parent=1 // loop_header
      %s16 = sphi 0, %s20
      %p17 = scmp.ge.s32.totalorder %s16, 6
      %s26 = sphi 0, %s28
      %s29 = sphi 0, %s26
      %s30 = sphi 0, %s29
      %s46 = sphi 0, %s30
      %s52 = sphi 0, %s54
      %s55 = sphi 0, %s52
      %s56 = sphi 0, %s55
      %s72 = sphi 0, %s56
      %s78 = sphi 0, %s80
      %s81 = sphi 0, %s78
      %s82 = sphi 0, %s81
      %s98 = sphi 0, %s82
      %s102 = sphi 0, %s102
      %s104 = sphi 0, %s102
      %s105 = sphi 0, %s104
      %s119 = sphi 0, %s105
      %s123 = sphi 0, %s123
      %s125 = sphi 0, %s123
      %s126 = sphi 0, %s125
      %s140 = sphi 0, %s126
      %s144 = sphi 0, %s144
      %s146 = sphi 0, %s144
      %s147 = sphi 0, %s146
      %s161 = sphi 0, %s147
      %s165 = sphi 0, %s165
      %s167 = sphi 0, %s165
      %s168 = sphi 0, %s167
      %s182 = sphi 0, %s168
      %s188 = sphi 0, %s190
      %s191 = sphi 0, %s188
      %s192 = sphi 0, %s191
      %s208 = sphi 0, %s192
    $region4: #{gat_layer.1} parent=1 // loop_header_branch
      %19 = sbr.rel (%p17) target = $region8
    $region5: #{gat_layer.1} parent=1 // loop_body
      %s21 = ssub.s32 %s16, 1
      %s22 = ssub.s32 %s16, 2
      %s23 = sadd.s32 %s16, 1
      %s24 = ssub.s32 %s16, %s23
      %p25 = scmp.eq.s32.totalorder %s24, 0
      %s27 = sadd.s32 %s26, 1
      %s28 = scalar_select %p25, %s26, %s27
      %p31 = pneg %p25
      %p32 = scmp.eq.s32.totalorder %s16, 3
      %p33 = por %p31, %p32
      %p34 = scmp.ne.s32.totalorder %s26, %s29
      %p35 = scmp.eq.s32.totalorder %s16, 0
      %p36 = por %p34, %p35
      %p37 = scmp.ne.s32.totalorder %s26, %s29
      %p38 = scmp.eq.s32.totalorder %s21, 3
      %p39 = por %p37, %p38
      %p40 = scmp.ne.s32.totalorder %s29, %s30
      %p41 = scmp.eq.s32.totalorder %s21, 0
      %p42 = por %p40, %p41
      %p43 = scmp.ne.s32.totalorder %s29, %s30
      %p44 = scmp.eq.s32.totalorder %s22, 3
      %p45 = por %p43, %p44
      %p47 = scmp.ne.s32.totalorder %s30, %s46
      %p48 = scmp.eq.s32.totalorder %s22, 0
      %p49 = por %p47, %p48
      %s50 = ssub.s32 %s16, %s23
      %p51 = scmp.eq.s32.totalorder %s50, 0
      %s53 = sadd.s32 %s52, 1
      %s54 = scalar_select %p51, %s52, %s53
      %p57 = pneg %p51
      %p58 = scmp.eq.s32.totalorder %s16, 3
      %p59 = por %p57, %p58
      %p60 = scmp.ne.s32.totalorder %s52, %s55
      %p61 = scmp.eq.s32.totalorder %s16, 0
      %p62 = por %p60, %p61
      %p63 = scmp.ne.s32.totalorder %s52, %s55
      %p64 = scmp.eq.s32.totalorder %s21, 3
      %p65 = por %p63, %p64
      %p66 = scmp.ne.s32.totalorder %s55, %s56
      %p67 = scmp.eq.s32.totalorder %s21, 0
      %p68 = por %p66, %p67
      %p69 = scmp.ne.s32.totalorder %s55, %s56
      %p70 = scmp.eq.s32.totalorder %s22, 3
      %p71 = por %p69, %p70
      %p73 = scmp.ne.s32.totalorder %s56, %s72
      %p74 = scmp.eq.s32.totalorder %s22, 0
      %p75 = por %p73, %p74
      %s76 = ssub.s32 %s16, %s23
      %p77 = scmp.eq.s32.totalorder %s76, 0
      %s79 = sadd.s32 %s78, 1
      %s80 = scalar_select %p77, %s78, %s79
      %p83 = pneg %p77
      %p84 = scmp.eq.s32.totalorder %s16, 3
      %p85 = por %p83, %p84
      %p86 = scmp.ne.s32.totalorder %s78, %s81
      %p87 = scmp.eq.s32.totalorder %s16, 0
      %p88 = por %p86, %p87
      %p89 = scmp.ne.s32.totalorder %s78, %s81
      %p90 = scmp.eq.s32.totalorder %s21, 3
      %p91 = por %p89, %p90
      %p92 = scmp.ne.s32.totalorder %s81, %s82
      %p93 = scmp.eq.s32.totalorder %s21, 0
      %p94 = por %p92, %p93
      %p95 = scmp.ne.s32.totalorder %s81, %s82
      %p96 = scmp.eq.s32.totalorder %s22, 3
      %p97 = por %p95, %p96
      %p99 = scmp.ne.s32.totalorder %s82, %s98
      %p100 = scmp.eq.s32.totalorder %s22, 0
      %p101 = por %p99, %p100
      %s103 = sadd.s32 %s102, 1
      %p106 = scmp.eq.s32.totalorder %s16, 3
      %p107 = scmp.ne.s32.totalorder %s102, %s104
      %p108 = scmp.eq.s32.totalorder %s16, 0
      %p109 = por %p107, %p108
      %p110 = scmp.ne.s32.totalorder %s102, %s104
      %p111 = scmp.eq.s32.totalorder %s21, 3
      %p112 = por %p110, %p111
      %p113 = scmp.ne.s32.totalorder %s104, %s105
      %p114 = scmp.eq.s32.totalorder %s21, 0
      %p115 = por %p113, %p114
      %p116 = scmp.ne.s32.totalorder %s104, %s105
      %p117 = scmp.eq.s32.totalorder %s22, 3
      %p118 = por %p116, %p117
      %p120 = scmp.ne.s32.totalorder %s105, %s119
      %p121 = scmp.eq.s32.totalorder %s22, 0
      %p122 = por %p120, %p121
      %s124 = sadd.s32 %s123, 1
      %p127 = scmp.eq.s32.totalorder %s16, 3
      %p128 = scmp.ne.s32.totalorder %s123, %s125
      %p129 = scmp.eq.s32.totalorder %s16, 0
      %p130 = por %p128, %p129
      %p131 = scmp.ne.s32.totalorder %s123, %s125
      %p132 = scmp.eq.s32.totalorder %s21, 3
      %p133 = por %p131, %p132
      %p134 = scmp.ne.s32.totalorder %s125, %s126
      %p135 = scmp.eq.s32.totalorder %s21, 0
      %p136 = por %p134, %p135
      %p137 = scmp.ne.s32.totalorder %s125, %s126
      %p138 = scmp.eq.s32.totalorder %s22, 3
      %p139 = por %p137, %p138
      %p141 = scmp.ne.s32.totalorder %s126, %s140
      %p142 = scmp.eq.s32.totalorder %s22, 0
      %p143 = por %p141, %p142
      %s145 = sadd.s32 %s144, 1
      %p148 = scmp.eq.s32.totalorder %s16, 3
      %p149 = scmp.ne.s32.totalorder %s144, %s146
      %p150 = scmp.eq.s32.totalorder %s16, 0
      %p151 = por %p149, %p150
      %p152 = scmp.ne.s32.totalorder %s144, %s146
      %p153 = scmp.eq.s32.totalorder %s21, 3
      %p154 = por %p152, %p153
      %p155 = scmp.ne.s32.totalorder %s146, %s147
      %p156 = scmp.eq.s32.totalorder %s21, 0
      %p157 = por %p155, %p156
      %p158 = scmp.ne.s32.totalorder %s146, %s147
      %p159 = scmp.eq.s32.totalorder %s22, 3
      %p160 = por %p158, %p159
      %p162 = scmp.ne.s32.totalorder %s147, %s161
      %p163 = scmp.eq.s32.totalorder %s22, 0
      %p164 = por %p162, %p163
      %s166 = sadd.s32 %s165, 1
      %p169 = scmp.eq.s32.totalorder %s16, 3
      %p170 = scmp.ne.s32.totalorder %s165, %s167
      %p171 = scmp.eq.s32.totalorder %s16, 0
      %p172 = por %p170, %p171
      %p173 = scmp.ne.s32.totalorder %s165, %s167
      %p174 = scmp.eq.s32.totalorder %s21, 3
      %p175 = por %p173, %p174
      %p176 = scmp.ne.s32.totalorder %s167, %s168
      %p177 = scmp.eq.s32.totalorder %s21, 0
      %p178 = por %p176, %p177
      %p179 = scmp.ne.s32.totalorder %s167, %s168
      %p180 = scmp.eq.s32.totalorder %s22, 3
      %p181 = por %p179, %p180
      %p183 = scmp.ne.s32.totalorder %s168, %s182
      %p184 = scmp.eq.s32.totalorder %s22, 0
      %p185 = por %p183, %p184
      %s186 = ssub.s32 %s16, %s23
      %p187 = scmp.eq.s32.totalorder %s186, 0
      %s189 = sadd.s32 %s188, 1
      %s190 = scalar_select %p187, %s188, %s189
      %p193 = pneg %p187
      %p194 = scmp.eq.s32.totalorder %s16, 3
      %p195 = por %p193, %p194
      %p196 = scmp.ne.s32.totalorder %s188, %s191
      %p197 = scmp.eq.s32.totalorder %s16, 0
      %p198 = por %p196, %p197
      %p199 = scmp.ne.s32.totalorder %s188, %s191
      %p200 = scmp.eq.s32.totalorder %s21, 3
      %p201 = por %p199, %p200
      %p202 = scmp.ne.s32.totalorder %s191, %s192
      %p203 = scmp.eq.s32.totalorder %s21, 0
      %p204 = por %p202, %p203
      %p205 = scmp.ne.s32.totalorder %s191, %s192
      %p206 = scmp.eq.s32.totalorder %s22, 3
      %p207 = por %p205, %p206
      %p209 = scmp.ne.s32.totalorder %s192, %s208
      %p210 = scmp.eq.s32.totalorder %s22, 0
      %p211 = por %p209, %p210
      %p212 = scmp.le.s32.totalorder 1, %s16
      %p213 = scmp.lt.s32.totalorder %s16, 5
      %p214 = pnand %p212, %p213
      %p215 = pneg %p214
      // Predicated region
      $region9: #{gat_layer.1} parent=5 // pred_check
        _
      $region10: #{gat_layer.1} parent=5 // pred_check_branch
        %217 = sbr.rel (%p214) target = $region12
      $region11: #{gat_layer.1} parent=5 // pred_region
        %s218 = ssub.s32 %s16, 1
        // Predicated region
        $region13: #{gat_layer.1} parent=11 // pred_check
          %p219 = pneg %p115
        $region14: #{gat_layer.1} parent=11 // pred_check_branch
          %221 = sbr.rel (%p219) target = $region16
        $region15: #{gat_layer.1} parent=11 // pred_region
          _
        $region16: #{gat_layer.1} parent=11 // pred_fallthru
          _
        // Predicated region
        $region17: #{gat_layer.1} parent=11 // pred_check
          %p222 = pneg %p136
        $region18: #{gat_layer.1} parent=11 // pred_check_branch
          %224 = sbr.rel (%p222) target = $region20
        $region19: #{gat_layer.1} parent=11 // pred_region
          _
        $region20: #{gat_layer.1} parent=11 // pred_fallthru
          _
        // Predicated region
        $region21: #{gat_layer.1} parent=11 // pred_check
          %p225 = pneg %p157
        $region22: #{gat_layer.1} parent=11 // pred_check_branch
          %227 = sbr.rel (%p225) target = $region24
        $region23: #{gat_layer.1} parent=11 // pred_region
          _
        $region24: #{gat_layer.1} parent=11 // pred_fallthru
          _
        // Predicated region
        $region25: #{gat_layer.1} parent=11 // pred_check
          %p228 = pneg %p178
        $region26: #{gat_layer.1} parent=11 // pred_check_branch
          %230 = sbr.rel (%p228) target = $region28
        $region27: #{gat_layer.1} parent=11 // pred_region
          _
        $region28: #{gat_layer.1} parent=11 // pred_fallthru
          _
      $region12: #{gat_layer.1} parent=5 // pred_fallthru
        _
      %p231 = scmp.lt.s32.totalorder %s16, 4
      // Predicated region
      $region29: #{gat_layer.1} parent=5 // pred_check
        %p232 = pneg %p231
      $region30: #{gat_layer.1} parent=5 // pred_check_branch
        %234 = sbr.rel (%p232) target = $region32
      $region31: #{gat_layer.1} parent=5 // pred_region
        // Predicated region
        $region33: #{gat_layer.1} parent=31 // pred_check
          %p235 = pneg %p36
        $region34: #{gat_layer.1} parent=31 // pred_check_branch
          %237 = sbr.rel (%p235) target = $region36
        $region35: #{gat_layer.1} parent=31 // pred_region
          %p238 = scmp.lt.s32.totalorder %s16, 3
          %s239 = scalar_select %p238, %s16, 3
          %s240 = smul.addr %s239, 8
          %s241 = scalar_lea.vmem %s0, %s240
        $region36: #{gat_layer.1} parent=31 // pred_fallthru
          _
        // Predicated region
        $region37: #{gat_layer.1} parent=31 // pred_check
          %p242 = pneg %p62
        $region38: #{gat_layer.1} parent=31 // pred_check_branch
          %244 = sbr.rel (%p242) target = $region40
        $region39: #{gat_layer.1} parent=31 // pred_region
          %p245 = scmp.lt.s32.totalorder %s16, 3
          %s246 = scalar_select %p245, %s16, 3
          %s247 = smul.addr %s246, 8
          %s248 = smul.addr %s247, 8
          %s249 = scalar_lea.vmem %s1, %s248
        $region40: #{gat_layer.1} parent=31 // pred_fallthru
          _
        // Predicated region
        $region41: #{gat_layer.1} parent=31 // pred_check
          %p250 = pneg %p88
        $region42: #{gat_layer.1} parent=31 // pred_check_branch
          %252 = sbr.rel (%p250) target = $region44
        $region43: #{gat_layer.1} parent=31 // pred_region
          %p253 = scmp.lt.s32.totalorder %s16, 3
          %s254 = scalar_select %p253, %s16, 3
          %s255 = smul.addr %s254, 8
          %s256 = scalar_lea.vmem %s2, %s255
        $region44: #{gat_layer.1} parent=31 // pred_fallthru
          _
      $region32: #{gat_layer.1} parent=5 // pred_fallthru
        _
      %p257 = scmp.le.s32.totalorder 1, %s16
      %p258 = scmp.lt.s32.totalorder %s16, 5
      %p259 = pnand %p257, %p258
      %p260 = pneg %p259
      // Predicated region
      $region45: #{gat_layer.1} parent=5 // pred_check
        _
      $region46: #{gat_layer.1} parent=5 // pred_check_branch
        %262 = sbr.rel (%p259) target = $region48
      $region47: #{gat_layer.1} parent=5 // pred_region
        %s263 = ssub.s32 %s16, 1
        %p264 = scmp.lt.s32.totalorder %s21, 3
        %s265 = scalar_select %p264, %s21, 3
        %s266 = smul.addr %s265, 8
        %s267 = scalar_lea.vmem %s0, %s266
        %p268 = pneg %p42
        %p269 = pneg %p39
        %p270 = scmp.lt.s32.totalorder %s21, 3
        %s271 = scalar_select %p270, %s21, 3
        %s272 = smul.addr %s271, 8
        %s273 = smul.addr %s272, 8
        %s274 = scalar_lea.vmem %s1, %s273
        %p275 = pneg %p68
        %p276 = pneg %p65
        %p277 = scmp.lt.s32.totalorder %s21, 3
        %s278 = scalar_select %p277, %s21, 3
        %s279 = smul.addr %s278, 8
        %s280 = scalar_lea.vmem %s2, %s279
        %p281 = pneg %p94
        %p282 = pneg %p91
        %p283 = pneg %p115
        %p284 = pneg %p112
        %p285 = pneg %p136
        %p286 = pneg %p133
        %p287 = pneg %p157
        %p288 = pneg %p154
        %p289 = pneg %p178
        %p290 = pneg %p175
        %p291 = pneg %p204
        %p292 = pneg %p201
        %s293 = sand.u32 %s191, 1
        %s294 = scalar_lea.sflag [#allocation3], %s293
        %s295 = sand.u32 %s191, 1
        %s296 = smul.addr %s295, 8
        %s297 = scalar_lea.vmem [#allocation2], %s296
        %p298 = scmp.lt.s32.totalorder %s21, 3
        %s299 = scalar_select %p298, %s21, 3
        %s300 = smul.addr %s299, 8
        %s301 = scalar_lea.vmem %s0, %s300
        %p302 = scmp.lt.s32.totalorder %s21, 3
        %s303 = scalar_select %p302, %s21, 3
        %s304 = smul.addr %s303, 8
        %s305 = smul.addr %s304, 8
        %s306 = scalar_lea.vmem %s1, %s305
        %p307 = scmp.lt.s32.totalorder %s21, 3
        %s308 = scalar_select %p307, %s21, 3
        %s309 = smul.addr %s308, 8
        %s310 = scalar_lea.vmem %s2, %s309
        %v311 = vld [vmem:[%s6] sm:$0x1]
        %v312 = vld [vmem:[%s6 + $0x1] sm:$0x1]
        %v313 = vld [vmem:[%s6 + $0x2] sm:$0x1]
        %v314 = vld [vmem:[%s6 + $0x3] sm:$0x1]
        %v315 = vld [vmem:[%s6 + $0x4] sm:$0x1]
        %v316 = vld [vmem:[%s6 + $0x5] sm:$0x1]
        %v317 = vld [vmem:[%s6 + $0x6] sm:$0x1]
        %v318 = vld [vmem:[%s6 + $0x7] sm:$0x1]
        %v319 = vld [vmem:[%s301] sm:$0xff]
        %vm320 = vcmask 130048
        %v321 = vsel %vm320, %v319, 0.0
        %322 = vadd.xlane.f32.xlu0 %v321
        %v323 = vpop.xlane.xlu0 %322
        %v324 = vrcp.pop 16.0
        %v325 = vmul.f32 %v323, %v324
        %v326 = vsub.f32 %v319, %v325
        %v327 = vmul.f32 %v326, %v326
        %v328 = vsel %vm320, %v327, 0.0
        %329 = vadd.xlane.f32.xlu0 %v328
        %v330 = vpop.xlane.xlu0 %329
        %v331 = vmul.f32 %v330, %v324
        %v332 = vadd.f32 %v331, 1e-05
        %v333 = vrsqrt.pop %v332
        %v334 = vmul.f32 %v326, %v333
        %v335 = vlaneseq
        %v336 = vshrl.u32 %v335, 7
        %v337 = vsub.s32 0, %v336
        %v338 = vrot.slane %v311, %v337
        %v339 = vmul.f32 %v334, %v338
        %v340 = vlaneseq
        %v341 = vshrl.u32 %v340, 7
        %v342 = vsub.s32 0, %v341
        %v343 = vrot.slane %v312, %v342
        %v344 = vadd.f32 %v339, %v343
        %v345 = vld [vmem:[%s3] sm:$0xff]
        %v346 = vld [vmem:[%s3 + $0x8] sm:$0xff]
        %v347 = vlaneseq
        %v348 = vshrl.u32 %v347, 7
        %v349 = vsub.s32 0, %v348
        %v350 = vrot.slane %v313, %v349
        %v352 = vsel %vm320, %v344, 0
        %354 = vmatprep.subr.mxu0 0.0
        %355 = vmatpush1.msra.mxu0 %v345
        %356 = vmatprep.subr.mxu0 0.0
        %357 = vmatpush1.msra.mxu0 %v346
        %358 = vmatprep.subr.mxu0 0.0
        %359 = vmatpush1.msra.mxu0 0.0
        %360 = vmatprep.subr.mxu0 0.0
        %361 = vmatpush1.msra.mxu0 0.0
        %362 = vmatprep.subr.mxu0 0.0
        %363 = vmatpush1.msra.mxu0 0.0
        %364 = vmatprep.subr.mxu0 0.0
        %365 = vmatpush1.msra.mxu0 0.0
        %366 = vmatprep.subr.mxu0 0.0
        %367 = vmatpush1.msra.mxu0 0.0
        %368 = vmatprep.subr.mxu0 0.0
        %369 = vmatpush1.msra.mxu0 0.0
        %370 = vmatprep.subr.mxu0 0.0
        %371 = vmatpush1.msra.mxu0 0.0
        %372 = vmatprep.subr.mxu0 0.0
        %373 = vmatpush1.msra.mxu0 0.0
        %374 = vmatprep.subr.mxu0 0.0
        %375 = vmatpush1.msra.mxu0 0.0
        %376 = vmatprep.subr.mxu0 0.0
        %377 = vmatpush1.msra.mxu0 0.0
        %378 = vmatprep.subr.mxu0 0.0
        %379 = vmatpush1.msra.mxu0 0.0
        %380 = vmatprep.subr.mxu0 0.0
        %381 = vmatpush1.msra.mxu0 0.0
        %382 = vmatprep.subr.mxu0 0.0
        %383 = vmatpush1.msra.mxu0 0.0
        %384 = vmatprep.subr.mxu0 0.0
        %385 = vmatpush1.msra.mxu0 0.0
        %386 = vmatprep.subr.mxu0 0.0
        %387 = vmatpush1.msra.mxu0 0.0
        %388 = vmatprep.subr.mxu0 0.0
        %389 = vmatpush1.msra.mxu0 0.0
        %390 = vmatprep.subr.mxu0 0.0
        %391 = vmatpush1.msra.mxu0 0.0
        %392 = vmatprep.subr.mxu0 0.0
        %393 = vmatpush1.msra.mxu0 0.0
        %394 = vmatprep.subr.mxu0 0.0
        %395 = vmatpush1.msra.mxu0 0.0
        %396 = vmatprep.subr.mxu0 0.0
        %397 = vmatpush1.msra.mxu0 0.0
        %398 = vmatprep.subr.mxu0 0.0
        %399 = vmatpush1.msra.mxu0 0.0
        %400 = vmatprep.subr.mxu0 0.0
        %401 = vmatpush1.msra.mxu0 0.0
        %402 = vmatprep.subr.mxu0 0.0
        %403 = vmatpush1.msra.mxu0 0.0
        %404 = vmatprep.subr.mxu0 0.0
        %405 = vmatpush1.msra.mxu0 0.0
        %406 = vmatprep.subr.mxu0 0.0
        %407 = vmatpush1.msra.mxu0 0.0
        %408 = vmatprep.subr.mxu0 0.0
        %409 = vmatpush1.msra.mxu0 0.0
        %410 = vmatprep.subr.mxu0 0.0
        %411 = vmatpush1.msra.mxu0 0.0
        %412 = vmatprep.subr.mxu0 0.0
        %413 = vmatpush1.msra.mxu0 0.0
        %414 = vmatprep.subr.mxu0 0.0
        %415 = vmatpush1.msra.mxu0 0.0
        %416 = vmatprep.subr.mxu0 0.0
        %417 = vmatpush1.msra.mxu0 0.0
        %418 = vmatprep.mubr.f32.mxu0 0.0
        %419 = vmatmul.mubr.f32.gmra.mrb[0].mxu0 %v352
        %v420 = vpop.f32.mrb[0].mxu0
        %v421 = vadd.f32 %v350, %v420
        %v422 = vpop.f32.mrb[0].mxu0
        %423 = vdwg.mxu0
        %v424 = vld [vmem:[%s310] sm:$0xff]
        %v425 = vlaneseq
        %v426 = vshrl.u32 %v425, 7
        %v427 = vlaneseq
        %v428 = vand.u32 %v427, 127
        %vm429 = vcmp.eq.s32.totalorder %v426, %v428
        %v430 = vsel %vm429, 1.0, 0.0
        %v431 = vadd.f32 %v424, %v430
        %vm432 = vcmask 64512
        %v433 = vsel %vm432, %v431, 0.0
        %434 = vadd.xlane.f32.xlu0 %v433
        %v435 = vpop.xlane.xlu0 %434
        %v436 = vrsqrt.pop %v435
        %vm437 = vcmp.ne.f32.partialorder %v436, %v436
        %v438 = vsel %vm437, 0.0, %v436
        %v439 = vmul.f32 %v438, %v431
        %440 = vxpose.xlu0.b32.start [1/16] %v438, 128
        %441 = vxpose.xlu0.b32.cont [2/16] 0.0, 128
        %442 = vxpose.xlu0.b32.cont [3/16] 0.0, 128
        %443 = vxpose.xlu0.b32.cont [4/16] 0.0, 128
        %444 = vxpose.xlu0.b32.cont [5/16] 0.0, 128
        %445 = vxpose.xlu0.b32.cont [6/16] 0.0, 128
        %446 = vxpose.xlu0.b32.cont [7/16] 0.0, 128
        %447 = vxpose.xlu0.b32.cont [8/16] 0.0, 128
        %448 = vxpose.xlu0.b32.cont [9/16] 0.0, 128
        %449 = vxpose.xlu0.b32.cont [10/16] 0.0, 128
        %450 = vxpose.xlu0.b32.cont [11/16] 0.0, 128
        %451 = vxpose.xlu0.b32.cont [12/16] 0.0, 128
        %452 = vxpose.xlu0.b32.cont [13/16] 0.0, 128
        %453 = vxpose.xlu0.b32.cont [14/16] 0.0, 128
        %454 = vxpose.xlu0.b32.cont [15/16] 0.0, 128
        %455 = vxpose.xlu0.b32.end [16/16] 0.0, 128
        %v456 = vpop.trf.xlu0
        %v457 = vpop.trf.xlu0
        %v458 = vpop.trf.xlu0
        %v459 = vpop.trf.xlu0
        %v460 = vpop.trf.xlu0
        %v461 = vpop.trf.xlu0
        %v462 = vpop.trf.xlu0
        %v463 = vpop.trf.xlu0
        %v464 = vpop.trf.xlu0
        %v465 = vpop.trf.xlu0
        %v466 = vpop.trf.xlu0
        %v467 = vpop.trf.xlu0
        %v468 = vpop.trf.xlu0
        %v469 = vpop.trf.xlu0
        %v470 = vpop.trf.xlu0
        %v471 = vpop.trf.xlu0
        %v472 = vlaneseq
        %v473 = vshrl.u32 %v472, 7
        %v474 = vsub.s32 0, %v473
        %v475 = vrot.slane %v456, %v474
        %v476 = vmul.f32 %v439, %v475
        %v477 = vld [vmem:[%s4] sm:$0xff]
        %v478 = vld [vmem:[%s4 + $0x8] sm:$0xff]
        %v479 = vld [vmem:[%s4 + $0x10] sm:$0xff]
        %v480 = vld [vmem:[%s4 + $0x18] sm:$0xff]
        %v481 = vld [vmem:[%s4 + $0x20] sm:$0xff]
        %v482 = vld [vmem:[%s4 + $0x28] sm:$0xff]
        %v483 = vld [vmem:[%s4 + $0x30] sm:$0xff]
        %v484 = vld [vmem:[%s4 + $0x38] sm:$0xff]
        %vm485 = vcmask 261120
        %v487 = vsel %vm485, %v421, 0
        %489 = vmatprep.subr.mxu0 %v478
        %490 = vmatpush1.msra.mxu0 %v477
        %491 = vmatprep.subr.mxu0 %v480
        %492 = vmatpush1.msra.mxu0 %v479
        %493 = vmatprep.subr.mxu0 %v482
        %494 = vmatpush1.msra.mxu0 %v481
        %495 = vmatprep.subr.mxu0 %v484
        %496 = vmatpush1.msra.mxu0 %v483
        %497 = vmatprep.subr.mxu0 0.0
        %498 = vmatpush1.msra.mxu0 0.0
        %499 = vmatprep.subr.mxu0 0.0
        %500 = vmatpush1.msra.mxu0 0.0
        %501 = vmatprep.subr.mxu0 0.0
        %502 = vmatpush1.msra.mxu0 0.0
        %503 = vmatprep.subr.mxu0 0.0
        %504 = vmatpush1.msra.mxu0 0.0
        %505 = vmatprep.subr.mxu0 0.0
        %506 = vmatpush1.msra.mxu0 0.0
        %507 = vmatprep.subr.mxu0 0.0
        %508 = vmatpush1.msra.mxu0 0.0
        %509 = vmatprep.subr.mxu0 0.0
        %510 = vmatpush1.msra.mxu0 0.0
        %511 = vmatprep.subr.mxu0 0.0
        %512 = vmatpush1.msra.mxu0 0.0
        %513 = vmatprep.subr.mxu0 0.0
        %514 = vmatpush1.msra.mxu0 0.0
        %515 = vmatprep.subr.mxu0 0.0
        %516 = vmatpush1.msra.mxu0 0.0
        %517 = vmatprep.subr.mxu0 0.0
        %518 = vmatpush1.msra.mxu0 0.0
        %519 = vmatprep.subr.mxu0 0.0
        %520 = vmatpush1.msra.mxu0 0.0
        %521 = vmatprep.subr.mxu0 0.0
        %522 = vmatpush1.msra.mxu0 0.0
        %523 = vmatprep.subr.mxu0 0.0
        %524 = vmatpush1.msra.mxu0 0.0
        %525 = vmatprep.subr.mxu0 0.0
        %526 = vmatpush1.msra.mxu0 0.0
        %527 = vmatprep.subr.mxu0 0.0
        %528 = vmatpush1.msra.mxu0 0.0
        %529 = vmatprep.subr.mxu0 0.0
        %530 = vmatpush1.msra.mxu0 0.0
        %531 = vmatprep.subr.mxu0 0.0
        %532 = vmatpush1.msra.mxu0 0.0
        %533 = vmatprep.subr.mxu0 0.0
        %534 = vmatpush1.msra.mxu0 0.0
        %535 = vmatprep.subr.mxu0 0.0
        %536 = vmatpush1.msra.mxu0 0.0
        %537 = vmatprep.subr.mxu0 0.0
        %538 = vmatpush1.msra.mxu0 0.0
        %539 = vmatprep.subr.mxu0 0.0
        %540 = vmatpush1.msra.mxu0 0.0
        %541 = vmatprep.subr.mxu0 0.0
        %542 = vmatpush1.msra.mxu0 0.0
        %543 = vmatprep.subr.mxu0 0.0
        %544 = vmatpush1.msra.mxu0 0.0
        %545 = vmatprep.subr.mxu0 0.0
        %546 = vmatpush1.msra.mxu0 0.0
        %547 = vmatprep.subr.mxu0 0.0
        %548 = vmatpush1.msra.mxu0 0.0
        %549 = vmatprep.subr.mxu0 0.0
        %550 = vmatpush1.msra.mxu0 0.0
        %551 = vmatprep.subr.mxu0 0.0
        %552 = vmatpush1.msra.mxu0 0.0
        %553 = vmatprep.mubr.f32.mxu0 0.0
        %554 = vmatmul.mubr.f32.gmra.mrb[0].mxu0 %v487
        %v555 = vpop.f32.mrb[0].mxu0
        %v556 = vadd.f32 0.0, %v555
        %v557 = vpop.f32.mrb[0].mxu0
        %v558 = vadd.f32 0.0, %v557
        %559 = vdwg.mxu0
        %v560 = vld [vmem:[%s306] sm:$0xff]
        %v561 = vld [vmem:[%s306 + $0x8] sm:$0xff]
        %v562 = vld [vmem:[%s306 + $0x10] sm:$0xff]
        %v563 = vld [vmem:[%s306 + $0x18] sm:$0xff]
        %v564 = vld [vmem:[%s306 + $0x20] sm:$0xff]
        %v565 = vld [vmem:[%s306 + $0x28] sm:$0xff]
        %v566 = vld [vmem:[%s306 + $0x30] sm:$0xff]
        %v567 = vld [vmem:[%s306 + $0x38] sm:$0xff]
        %v568 = vld [vmem:[%s5] sm:$0xff]
        %v570 = vsel %vm432, %v560, 0
        %v573 = vsel %vm432, %v561, 0
        %v576 = vsel %vm432, %v562, 0
        %v579 = vsel %vm432, %v563, 0
        %v582 = vsel %vm432, %v564, 0
        %v585 = vsel %vm432, %v565, 0
        %v588 = vsel %vm432, %v566, 0
        %v591 = vsel %vm432, %v567, 0
        %593 = vmatprep.subr.mxu0 0.0
        %594 = vmatpush1.msra.mxu0 %v568
        %595 = vmatprep.subr.mxu0 0.0
        %596 = vmatpush1.msra.mxu0 0.0
        %597 = vmatprep.subr.mxu0 0.0
        %598 = vmatpush1.msra.mxu0 0.0
        %599 = vmatprep.subr.mxu0 0.0
        %600 = vmatpush1.msra.mxu0 0.0
        %601 = vmatprep.subr.mxu0 0.0
        %602 = vmatpush1.msra.mxu0 0.0
        %603 = vmatprep.subr.mxu0 0.0
        %604 = vmatpush1.msra.mxu0 0.0
        %605 = vmatprep.subr.mxu0 0.0
        %606 = vmatpush1.msra.mxu0 0.0
        %607 = vmatprep.subr.mxu0 0.0
        %608 = vmatpush1.msra.mxu0 0.0
        %609 = vmatprep.subr.mxu0 0.0
        %610 = vmatpush1.msra.mxu0 0.0
        %611 = vmatprep.subr.mxu0 0.0
        %612 = vmatpush1.msra.mxu0 0.0
        %613 = vmatprep.subr.mxu0 0.0
        %614 = vmatpush1.msra.mxu0 0.0
        %615 = vmatprep.subr.mxu0 0.0
        %616 = vmatpush1.msra.mxu0 0.0
        %617 = vmatprep.subr.mxu0 0.0
        %618 = vmatpush1.msra.mxu0 0.0
        %619 = vmatprep.subr.mxu0 0.0
        %620 = vmatpush1.msra.mxu0 0.0
        %621 = vmatprep.subr.mxu0 0.0
        %622 = vmatpush1.msra.mxu0 0.0
        %623 = vmatprep.subr.mxu0 0.0
        %624 = vmatpush1.msra.mxu0 0.0
        %625 = vmatprep.subr.mxu0 0.0
        %626 = vmatpush1.msra.mxu0 0.0
        %627 = vmatprep.subr.mxu0 0.0
        %628 = vmatpush1.msra.mxu0 0.0
        %629 = vmatprep.subr.mxu0 0.0
        %630 = vmatpush1.msra.mxu0 0.0
        %631 = vmatprep.subr.mxu0 0.0
        %632 = vmatpush1.msra.mxu0 0.0
        %633 = vmatprep.subr.mxu0 0.0
        %634 = vmatpush1.msra.mxu0 0.0
        %635 = vmatprep.subr.mxu0 0.0
        %636 = vmatpush1.msra.mxu0 0.0
        %637 = vmatprep.subr.mxu0 0.0
        %638 = vmatpush1.msra.mxu0 0.0
        %639 = vmatprep.subr.mxu0 0.0
        %640 = vmatpush1.msra.mxu0 0.0
        %641 = vmatprep.subr.mxu0 0.0
        %642 = vmatpush1.msra.mxu0 0.0
        %643 = vmatprep.subr.mxu0 0.0
        %644 = vmatpush1.msra.mxu0 0.0
        %645 = vmatprep.subr.mxu0 0.0
        %646 = vmatpush1.msra.mxu0 0.0
        %647 = vmatprep.subr.mxu0 0.0
        %648 = vmatpush1.msra.mxu0 0.0
        %649 = vmatprep.subr.mxu0 0.0
        %650 = vmatpush1.msra.mxu0 0.0
        %651 = vmatprep.subr.mxu0 0.0
        %652 = vmatpush1.msra.mxu0 0.0
        %653 = vmatprep.subr.mxu0 0.0
        %654 = vmatpush1.msra.mxu0 0.0
        %655 = vmatprep.subr.mxu0 0.0
        %656 = vmatpush1.msra.mxu0 0.0
        %657 = vmatprep.mubr.f32.mxu0 0.0
        %658 = vmatmul.mubr.f32.gmra.mrb[0].mxu0 %v570
        %v659 = vpop.f32.mrb[0].mxu0
        %v660 = vadd.f32 0.0, %v659
        %v661 = vpop.f32.mrb[0].mxu0
        %662 = vmatprep.mubr.f32.mxu0 0.0
        %663 = vmatmul.mubr.f32.gmra.mrb[0].mxu0 %v573
        %v664 = vpop.f32.mrb[0].mxu0
        %v665 = vadd.f32 0.0, %v664
        %v666 = vpop.f32.mrb[0].mxu0
        %667 = vmatprep.mubr.f32.mxu0 0.0
        %668 = vmatmul.mubr.f32.gmra.mrb[0].mxu0 %v576
        %v669 = vpop.f32.mrb[0].mxu0
        %v670 = vadd.f32 0.0, %v669
        %v671 = vpop.f32.mrb[0].mxu0
        %672 = vmatprep.mubr.f32.mxu0 0.0
        %673 = vmatmul.mubr.f32.gmra.mrb[0].mxu0 %v579
        %v674 = vpop.f32.mrb[0].mxu0
        %v675 = vadd.f32 0.0, %v674
        %v676 = vpop.f32.mrb[0].mxu0
        %677 = vmatprep.mubr.f32.mxu0 0.0
        %678 = vmatmul.mubr.f32.gmra.mrb[0].mxu0 %v582
        %v679 = vpop.f32.mrb[0].mxu0
        %v680 = vadd.f32 0.0, %v679
        %v681 = vpop.f32.mrb[0].mxu0
        %682 = vmatprep.mubr.f32.mxu0 0.0
        %683 = vmatmul.mubr.f32.gmra.mrb[0].mxu0 %v585
        %v684 = vpop.f32.mrb[0].mxu0
        %v685 = vadd.f32 0.0, %v684
        %v686 = vpop.f32.mrb[0].mxu0
        %687 = vmatprep.mubr.f32.mxu0 0.0
        %688 = vmatmul.mubr.f32.gmra.mrb[0].mxu0 %v588
        %v689 = vpop.f32.mrb[0].mxu0
        %v690 = vadd.f32 0.0, %v689
        %v691 = vpop.f32.mrb[0].mxu0
        %692 = vmatprep.mubr.f32.mxu0 0.0
        %693 = vmatmul.mubr.f32.gmra.mrb[0].mxu0 %v591
        %v694 = vpop.f32.mrb[0].mxu0
        %v695 = vadd.f32 0.0, %v694
        %v696 = vpop.f32.mrb[0].mxu0
        %697 = vdwg.mxu0
        %v699 = vcombine.high %v556, %v556
        %v701 = vunpack.c.l.s4 1966171168
        %v702 = vunpack.c.0.s8 %v701
        %v703 = vlaneseq
        %v704 = vshrl.u32 %v703, 7
        %v705 = vsub.s32 %v702, %v704
        %v706 = vrot.slane %v556, %v705
        %v708 = vunpack.c.l.s4 1966171168
        %v709 = vunpack.c.0.s8 %v708
        %v710 = vlaneseq
        %v711 = vshrl.u32 %v710, 7
        %v712 = vsub.s32 %v709, %v711
        %v713 = vrot.slane %v699, %v712
        %v714 = vcombine.high %v706, %v706
        %v715 = vcombine.high %v713, %v713
        %v717 = vunpack.c.l.s4 1966171168
        %v718 = vunpack.c.0.s8 %v717
        %v719 = vlaneseq
        %v720 = vshrl.u32 %v719, 7
        %v721 = vsub.s32 %v718, %v720
        %v722 = vrot.slane %v706, %v721
        %v724 = vunpack.c.l.s4 1966171168
        %v725 = vunpack.c.0.s8 %v724
        %v726 = vlaneseq
        %v727 = vshrl.u32 %v726, 7
        %v728 = vsub.s32 %v725, %v727
        %v729 = vrot.slane %v713, %v728
        %v731 = vunpack.c.l.s4 1966171168
        %v732 = vunpack.c.0.s8 %v731
        %v733 = vlaneseq
        %v734 = vshrl.u32 %v733, 7
        %v735 = vsub.s32 %v732, %v734
        %v736 = vrot.slane %v714, %v735
        %v738 = vunpack.c.l.s4 1966171168
        %v739 = vunpack.c.0.s8 %v738
        %v740 = vlaneseq
        %v741 = vshrl.u32 %v740, 7
        %v742 = vsub.s32 %v739, %v741
        %v743 = vrot.slane %v715, %v742
        %v744 = vcombine.high %v722, %v722
        %v745 = vcombine.high %v729, %v729
        %v746 = vcombine.high %v736, %v736
        %v747 = vcombine.high %v743, %v743
        %v748 = vlaneseq
        %v749 = vshrl.u32 %v748, 7
        %v750 = vsub.s32 0, %v749
        %v751 = vrot.slane %v722, %v750
        %v752 = vlaneseq
        %v753 = vshrl.u32 %v752, 7
        %v754 = vsub.s32 0, %v753
        %v755 = vrot.slane %v736, %v754
        %v756 = vlaneseq
        %v757 = vshrl.u32 %v756, 7
        %v758 = vsub.s32 0, %v757
        %v759 = vrot.slane %v744, %v758
        %v760 = vlaneseq
        %v761 = vshrl.u32 %v760, 7
        %v762 = vsub.s32 0, %v761
        %v763 = vrot.slane %v746, %v762
        %v764 = vlaneseq
        %v765 = vshrl.u32 %v764, 7
        %v766 = vsub.s32 0, %v765
        %v767 = vrot.slane %v729, %v766
        %v768 = vlaneseq
        %v769 = vshrl.u32 %v768, 7
        %v770 = vsub.s32 0, %v769
        %v771 = vrot.slane %v743, %v770
        %v772 = vlaneseq
        %v773 = vshrl.u32 %v772, 7
        %v774 = vsub.s32 0, %v773
        %v775 = vrot.slane %v745, %v774
        %v776 = vlaneseq
        %v777 = vshrl.u32 %v776, 7
        %v778 = vsub.s32 0, %v777
        %v779 = vrot.slane %v747, %v778
        %789 = vrot.lane.b32.xlu0 %v556, 56
        %v790 = vpop.permute.xlu0 %789
        %791 = vrot.lane.b32.xlu0 %v558, 56
        %v792 = vpop.permute.xlu0 %791
        %vm793 = vcmask 457728
        %v794 = vsel %vm793, %v790, %v792
        %v796 = vadd.f32 %v751, %v794
        %v797 = vadd.f32 %v755, %v794
        %v798 = vadd.f32 %v759, %v794
        %v799 = vadd.f32 %v763, %v794
        %v800 = vadd.f32 %v767, %v794
        %v801 = vadd.f32 %v771, %v794
        %v802 = vadd.f32 %v775, %v794
        %v803 = vadd.f32 %v779, %v794
        %v804 = vadd.f32 %v796, %v660
        %v805 = vadd.f32 %v797, %v665
        %v806 = vadd.f32 %v798, %v670
        %v807 = vadd.f32 %v799, %v675
        %v808 = vadd.f32 %v800, %v680
        %v809 = vadd.f32 %v801, %v685
        %v810 = vadd.f32 %v802, %v690
        %v811 = vadd.f32 %v803, %v695
        %v812 = vlaneseq
        %v813 = vshrl.u32 %v812, 7
        %v814 = vsub.s32 0, %v813
        %v815 = vrot.slane %v314, %v814
        %v816 = vadd.f32 %v804, %v815
        %v817 = vadd.f32 %v805, %v815
        %v818 = vadd.f32 %v806, %v815
        %v819 = vadd.f32 %v807, %v815
        %v820 = vadd.f32 %v808, %v815
        %v821 = vadd.f32 %v809, %v815
        %v822 = vadd.f32 %v810, %v815
        %v823 = vadd.f32 %v811, %v815
        %v824 = vmul.f32 %v816, 0.5
        %v825 = vmul.f32 %v817, 0.5
        %v826 = vmul.f32 %v818, 0.5
        %v827 = vmul.f32 %v819, 0.5
        %v828 = vmul.f32 %v820, 0.5
        %v829 = vmul.f32 %v821, 0.5
        %v830 = vmul.f32 %v822, 0.5
        %v831 = vmul.f32 %v823, 0.5
        %v832 = vmul.f32 %v816, 0.044715
        %v833 = vmul.f32 %v817, 0.044715
        %v834 = vmul.f32 %v818, 0.044715
        %v835 = vmul.f32 %v819, 0.044715
        %v836 = vmul.f32 %v820, 0.044715
        %v837 = vmul.f32 %v821, 0.044715
        %v838 = vmul.f32 %v822, 0.044715
        %v839 = vmul.f32 %v823, 0.044715
        %v840 = vmul.f32 %v832, %v816
        %v841 = vmul.f32 %v833, %v817
        %v842 = vmul.f32 %v834, %v818
        %v843 = vmul.f32 %v835, %v819
        %v844 = vmul.f32 %v836, %v820
        %v845 = vmul.f32 %v837, %v821
        %v846 = vmul.f32 %v838, %v822
        %v847 = vmul.f32 %v839, %v823
        %v848 = vmul.f32 %v840, %v816
        %v849 = vmul.f32 %v841, %v817
        %v850 = vmul.f32 %v842, %v818
        %v851 = vmul.f32 %v843, %v819
        %v852 = vmul.f32 %v844, %v820
        %v853 = vmul.f32 %v845, %v821
        %v854 = vmul.f32 %v846, %v822
        %v855 = vmul.f32 %v847, %v823
        %v856 = vadd.f32 %v816, %v848
        %v857 = vadd.f32 %v817, %v849
        %v858 = vadd.f32 %v818, %v850
        %v859 = vadd.f32 %v819, %v851
        %v860 = vadd.f32 %v820, %v852
        %v861 = vadd.f32 %v821, %v853
        %v862 = vadd.f32 %v822, %v854
        %v863 = vadd.f32 %v823, %v855
        %v864 = vmul.f32 %v856, 0.7978846
        %v865 = vmul.f32 %v857, 0.7978846
        %v866 = vmul.f32 %v858, 0.7978846
        %v867 = vmul.f32 %v859, 0.7978846
        %v868 = vmul.f32 %v860, 0.7978846
        %v869 = vmul.f32 %v861, 0.7978846
        %v870 = vmul.f32 %v862, 0.7978846
        %v871 = vmul.f32 %v863, 0.7978846
        %v872 = vtanh.pop %v864
        %v873 = vtanh.pop %v865
        %v874 = vtanh.pop %v866
        %v875 = vtanh.pop %v867
        %v876 = vtanh.pop %v868
        %v877 = vtanh.pop %v869
        %v878 = vtanh.pop %v870
        %v879 = vtanh.pop %v871
        %v880 = vadd.f32 %v872, 1.0
        %v881 = vadd.f32 %v873, 1.0
        %v882 = vadd.f32 %v874, 1.0
        %v883 = vadd.f32 %v875, 1.0
        %v884 = vadd.f32 %v876, 1.0
        %v885 = vadd.f32 %v877, 1.0
        %v886 = vadd.f32 %v878, 1.0
        %v887 = vadd.f32 %v879, 1.0
        %v888 = vmul.f32 %v824, %v880
        %v889 = vmul.f32 %v825, %v881
        %v890 = vmul.f32 %v826, %v882
        %v891 = vmul.f32 %v827, %v883
        %v892 = vmul.f32 %v828, %v884
        %v893 = vmul.f32 %v829, %v885
        %v894 = vmul.f32 %v830, %v886
        %v895 = vmul.f32 %v831, %v887
        %v896 = vlaneseq
        %v897 = vshrl.u32 %v896, 7
        %v898 = vsub.s32 0, %v897
        %v899 = vrot.slane %v315, %v898
        %v900 = vmul.f32 %v888, %v899
        %v901 = vmul.f32 %v889, %v899
        %v902 = vmul.f32 %v890, %v899
        %v903 = vmul.f32 %v891, %v899
        %v904 = vmul.f32 %v892, %v899
        %v905 = vmul.f32 %v893, %v899
        %v906 = vmul.f32 %v894, %v899
        %v907 = vmul.f32 %v895, %v899
        %vm908 = vcmask 588800
        %v909 = vsel %vm908, %v900, 0.0
        %910 = vadd.xlane.f32.xlu0 %v909
        %v911 = vpop.xlane.xlu0 %910
        %v912 = vsel %vm908, %v901, 0.0
        %913 = vadd.xlane.f32.xlu0 %v912
        %v914 = vpop.xlane.xlu0 %913
        %v915 = vsel %vm908, %v902, 0.0
        %916 = vadd.xlane.f32.xlu0 %v915
        %v917 = vpop.xlane.xlu0 %916
        %v918 = vsel %vm908, %v903, 0.0
        %919 = vadd.xlane.f32.xlu0 %v918
        %v920 = vpop.xlane.xlu0 %919
        %v921 = vsel %vm908, %v904, 0.0
        %922 = vadd.xlane.f32.xlu0 %v921
        %v923 = vpop.xlane.xlu0 %922
        %v924 = vsel %vm908, %v905, 0.0
        %925 = vadd.xlane.f32.xlu0 %v924
        %v926 = vpop.xlane.xlu0 %925
        %v927 = vsel %vm908, %v906, 0.0
        %928 = vadd.xlane.f32.xlu0 %v927
        %v929 = vpop.xlane.xlu0 %928
        %v930 = vsel %vm908, %v907, 0.0
        %931 = vadd.xlane.f32.xlu0 %v930
        %v932 = vpop.xlane.xlu0 %931
        %s934 = vtos %v318
        %v935 = vstv %s934
        %v937 = vadd.f32 %v911, %v935
        %v938 = vadd.f32 %v914, %v935
        %v939 = vadd.f32 %v917, %v935
        %v940 = vadd.f32 %v920, %v935
        %v941 = vadd.f32 %v923, %v935
        %v942 = vadd.f32 %v926, %v935
        %v943 = vadd.f32 %v929, %v935
        %v944 = vadd.f32 %v932, %v935
        %vm945 = vcmp.ge.f32.partialorder %v937, 0.0
        %vm946 = vcmp.ge.f32.partialorder %v938, 0.0
        %vm947 = vcmp.ge.f32.partialorder %v939, 0.0
        %vm948 = vcmp.ge.f32.partialorder %v940, 0.0
        %vm949 = vcmp.ge.f32.partialorder %v941, 0.0
        %vm950 = vcmp.ge.f32.partialorder %v942, 0.0
        %vm951 = vcmp.ge.f32.partialorder %v943, 0.0
        %vm952 = vcmp.ge.f32.partialorder %v944, 0.0
        %v953 = vmul.f32 %v937, 0.2
        %v954 = vmul.f32 %v938, 0.2
        %v955 = vmul.f32 %v939, 0.2
        %v956 = vmul.f32 %v940, 0.2
        %v957 = vmul.f32 %v941, 0.2
        %v958 = vmul.f32 %v942, 0.2
        %v959 = vmul.f32 %v943, 0.2
        %v960 = vmul.f32 %v944, 0.2
        %v961 = vsel %vm945, %v937, %v953
        %v962 = vsel %vm946, %v938, %v954
        %v963 = vsel %vm947, %v939, %v955
        %v964 = vsel %vm948, %v940, %v956
        %v965 = vsel %vm949, %v941, %v957
        %v966 = vsel %vm950, %v942, %v958
        %v967 = vsel %vm951, %v943, %v959
        %v968 = vsel %vm952, %v944, %v960
        %vm969 = vcmp.gt.f32.partialorder %v476, 0.0
        %v978 = vlaneseq
        %v979 = vshrl.u32 %v978, 7
        %v980 = vsub.s32 %v428, %v979
        %v981 = vrot.slane %v961, %v980
        %v982 = vlaneseq
        %v983 = vshrl.u32 %v982, 7
        %v984 = vsub.s32 %v428, %v983
        %v985 = vrot.slane %v962, %v984
        %v986 = vlaneseq
        %v987 = vshrl.u32 %v986, 7
        %v988 = vsub.s32 %v428, %v987
        %v989 = vrot.slane %v963, %v988
        %v990 = vlaneseq
        %v991 = vshrl.u32 %v990, 7
        %v992 = vsub.s32 %v428, %v991
        %v993 = vrot.slane %v964, %v992
        %v994 = vlaneseq
        %v995 = vshrl.u32 %v994, 7
        %v996 = vsub.s32 %v428, %v995
        %v997 = vrot.slane %v965, %v996
        %v998 = vlaneseq
        %v999 = vshrl.u32 %v998, 7
        %v1000 = vsub.s32 %v428, %v999
        %v1001 = vrot.slane %v966, %v1000
        %v1002 = vlaneseq
        %v1003 = vshrl.u32 %v1002, 7
        %v1004 = vsub.s32 %v428, %v1003
        %v1005 = vrot.slane %v967, %v1004
        %v1006 = vlaneseq
        %v1007 = vshrl.u32 %v1006, 7
        %v1008 = vsub.s32 %v428, %v1007
        %v1009 = vrot.slane %v968, %v1008
        %vm1010 = vcmask 1041409
        %v1011 = vsel %vm1010, %v985, %v981
        %vm1012 = vcmask 1042434
        %v1013 = vsel %vm1012, %v989, %v1011
        %vm1014 = vcmask 1043459
        %v1015 = vsel %vm1014, %v993, %v1013
        %vm1016 = vcmask 1044484
        %v1017 = vsel %vm1016, %v997, %v1015
        %vm1018 = vcmask 1045509
        %v1019 = vsel %vm1018, %v1001, %v1017
        %vm1020 = vcmask 1046534
        %v1021 = vsel %vm1020, %v1005, %v1019
        %vm1022 = vcmask 1047559
        %v1023 = vsel %vm1022, %v1009, %v1021
        %v1025 = vsel %vm969, %v1023, -1e+12
        %v1026 = vsel %vm432, %v1025, -inf
        %1027 = vmax.xlane.f32.xlu0 %v1026
        %v1028 = vpop.xlane.xlu0 %1027
        %v1029 = vsub.f32 %v1025, %v1028
        %v1030 = vmul.f32 %v1029, 1.442695
        %v1031 = vpow.pop %v1030
        %v1032 = vsel %vm432, %v1031, 0.0
        %1033 = vadd.xlane.f32.xlu0 %v1032
        %v1034 = vpop.xlane.xlu0 %1033
        %v1035 = vrcp.pop %v1034
        %v1036 = vmul.f32 %v1031, %v1035
        %v1038 = vsel %vm432, %v1036, 0
        %1040 = vmatprep.subr.mxu0 0.0
        %1041 = vmatpush1.msra.mxu0 %v421
        %1042 = vmatprep.subr.mxu0 0.0
        %1043 = vmatpush1.msra.mxu0 0.0
        %1044 = vmatprep.subr.mxu0 0.0
        %1045 = vmatpush1.msra.mxu0 0.0
        %1046 = vmatprep.subr.mxu0 0.0
        %1047 = vmatpush1.msra.mxu0 0.0
        %1048 = vmatprep.subr.mxu0 0.0
        %1049 = vmatpush1.msra.mxu0 0.0
        %1050 = vmatprep.subr.mxu0 0.0
        %1051 = vmatpush1.msra.mxu0 0.0
        %1052 = vmatprep.subr.mxu0 0.0
        %1053 = vmatpush1.msra.mxu0 0.0
        %1054 = vmatprep.subr.mxu0 0.0
        %1055 = vmatpush1.msra.mxu0 0.0
        %1056 = vmatprep.subr.mxu0 0.0
        %1057 = vmatpush1.msra.mxu0 0.0
        %1058 = vmatprep.subr.mxu0 0.0
        %1059 = vmatpush1.msra.mxu0 0.0
        %1060 = vmatprep.subr.mxu0 0.0
        %1061 = vmatpush1.msra.mxu0 0.0
        %1062 = vmatprep.subr.mxu0 0.0
        %1063 = vmatpush1.msra.mxu0 0.0
        %1064 = vmatprep.subr.mxu0 0.0
        %1065 = vmatpush1.msra.mxu0 0.0
        %1066 = vmatprep.subr.mxu0 0.0
        %1067 = vmatpush1.msra.mxu0 0.0
        %1068 = vmatprep.subr.mxu0 0.0
        %1069 = vmatpush1.msra.mxu0 0.0
        %1070 = vmatprep.subr.mxu0 0.0
        %1071 = vmatpush1.msra.mxu0 0.0
        %1072 = vmatprep.subr.mxu0 0.0
        %1073 = vmatpush1.msra.mxu0 0.0
        %1074 = vmatprep.subr.mxu0 0.0
        %1075 = vmatpush1.msra.mxu0 0.0
        %1076 = vmatprep.subr.mxu0 0.0
        %1077 = vmatpush1.msra.mxu0 0.0
        %1078 = vmatprep.subr.mxu0 0.0
        %1079 = vmatpush1.msra.mxu0 0.0
        %1080 = vmatprep.subr.mxu0 0.0
        %1081 = vmatpush1.msra.mxu0 0.0
        %1082 = vmatprep.subr.mxu0 0.0
        %1083 = vmatpush1.msra.mxu0 0.0
        %1084 = vmatprep.subr.mxu0 0.0
        %1085 = vmatpush1.msra.mxu0 0.0
        %1086 = vmatprep.subr.mxu0 0.0
        %1087 = vmatpush1.msra.mxu0 0.0
        %1088 = vmatprep.subr.mxu0 0.0
        %1089 = vmatpush1.msra.mxu0 0.0
        %1090 = vmatprep.subr.mxu0 0.0
        %1091 = vmatpush1.msra.mxu0 0.0
        %1092 = vmatprep.subr.mxu0 0.0
        %1093 = vmatpush1.msra.mxu0 0.0
        %1094 = vmatprep.subr.mxu0 0.0
        %1095 = vmatpush1.msra.mxu0 0.0
        %1096 = vmatprep.subr.mxu0 0.0
        %1097 = vmatpush1.msra.mxu0 0.0
        %1098 = vmatprep.subr.mxu0 0.0
        %1099 = vmatpush1.msra.mxu0 0.0
        %1100 = vmatprep.subr.mxu0 0.0
        %1101 = vmatpush1.msra.mxu0 0.0
        %1102 = vmatprep.subr.mxu0 0.0
        %1103 = vmatpush1.msra.mxu0 0.0
        %1104 = vmatprep.mubr.f32.mxu0 0.0
        %1105 = vmatmul.mubr.f32.gmra.mrb[0].mxu0 %v1038
        %v1106 = vpop.f32.mrb[0].mxu0
        %v1107 = vadd.f32 0.0, %v1106
        %v1108 = vpop.f32.mrb[0].mxu0
        %1109 = vdwg.mxu0
        %v1110 = vsel %vm485, %v1107, 0.0
        %1111 = vadd.xlane.f32.xlu0 %v1110
        %v1112 = vpop.xlane.xlu0 %1111
        %v1113 = vrcp.pop 32.0
        %v1114 = vmul.f32 %v1112, %v1113
        %v1115 = vsub.f32 %v1107, %v1114
        %v1116 = vmul.f32 %v1115, %v1115
        %v1117 = vsel %vm485, %v1116, 0.0
        %1118 = vadd.xlane.f32.xlu0 %v1117
        %v1119 = vpop.xlane.xlu0 %1118
        %v1120 = vmul.f32 %v1119, %v1113
        %v1121 = vadd.f32 %v1120, 1e-05
        %v1122 = vrsqrt.pop %v1121
        %v1123 = vmul.f32 %v1115, %v1122
        %v1124 = vlaneseq
        %v1125 = vshrl.u32 %v1124, 7
        %v1126 = vsub.s32 0, %v1125
        %v1127 = vrot.slane %v316, %v1126
        %v1128 = vmul.f32 %v1123, %v1127
        %v1129 = vlaneseq
        %v1130 = vshrl.u32 %v1129, 7
        %v1131 = vsub.s32 0, %v1130
        %v1132 = vrot.slane %v317, %v1131
        %v1133 = vadd.f32 %v1128, %v1132
        %1134 = vst.msk [vmem:[%s297] sm:$0xff] %vm485, %v1133
        %s1135 = sand.u32 %s191, 1
        %s1136 = scalar_lea.sflag [#allocation3], %s1135
        %s1137 = sand.u32 %s191, 1
        %s1138 = smul.addr %s1137, 8
        %s1139 = scalar_lea.vmem [#allocation2], %s1138
        // Predicated region
        $region49: #{gat_layer.1} parent=47 // pred_check
          %p1140 = pneg %p201
        $region50: #{gat_layer.1} parent=47 // pred_check_branch
          %1142 = sbr.rel (%p1140) target = $region52
        $region51: #{gat_layer.1} parent=47 // pred_region
          %s1144 = ssub.s32 128, 128
          %1145 = vsyncadd %s1136, %s1144
          %s1146 = smul.addr %s21, 128
          %s1147 = scalar_lea.hbm %s7, %s1146
          %s1149 = sshll.u32 %s1139, 4
          %s1150 = int_to_ptr.vmem [resolvable:$true] %s1149
          %1152 = dma.vmem_to_hbm [thread:$0]  %s1150, 128, %s1147, %s1136
        $region52: #{gat_layer.1} parent=47 // pred_fallthru
          _
      $region48: #{gat_layer.1} parent=5 // pred_fallthru
        _
      %p1153 = scmp.le.s32.totalorder 2, %s16
      // Predicated region
      $region53: #{gat_layer.1} parent=5 // pred_check
        %p1154 = pneg %p1153
      $region54: #{gat_layer.1} parent=5 // pred_check_branch
        %1156 = sbr.rel (%p1154) target = $region56
      $region55: #{gat_layer.1} parent=5 // pred_region
        %s1157 = ssub.s32 %s16, 2
        // Predicated region
        $region57: #{gat_layer.1} parent=55 // pred_check
          %p1158 = pneg %p207
        $region58: #{gat_layer.1} parent=55 // pred_check_branch
          %1160 = sbr.rel (%p1158) target = $region60
        $region59: #{gat_layer.1} parent=55 // pred_region
          %s1161 = sand.u32 %s192, 1
          %s1162 = scalar_lea.sflag [#allocation3], %s1161
          %s1163 = sand.u32 %s192, 1
          %s1164 = smul.addr %s1163, 8
          %s1165 = scalar_lea.vmem [#allocation2], %s1164
          %1166 = dma.done %s1162, 128
        $region60: #{gat_layer.1} parent=55 // pred_fallthru
          _
      $region56: #{gat_layer.1} parent=5 // pred_fallthru
        _
    $region6: #{gat_layer.1} parent=1 // loop_footer
      %s20 = sadd.s32 1, %s16
    $region7: #{gat_layer.1} parent=1 // loop_footer_branch
      %15 = sbr.rel target = $region3
    $region8: #{gat_layer.1} parent=1 // loop_exit
      _
    %1167 = vsyncpa [#allocation3], 1
    %s1168 = scalar_lea.sflag [#allocation3], 1
    %1169 = vsyncpa %s1168, 1

</llo_original>
